<compile_context>
chip_gen: v5e
topology: v5e:2x2
jax: 0.10.0
libtpu: 0.0.40
codegen_flags: <defaults>
</compile_context>

<pallas_src>
import functools

import jax
import jax.numpy as jnp
from jax import lax
from jax.experimental import pallas as pl
from jax.experimental.pallas import tpu as pltpu


def _round_up(v, m):
    return (v + m - 1) // m * m


def final_head_kernel(x_ref, w1_ref, b1_ref, w2_ref, b2_ref, o_ref, *, width, hw):
    # x_ref : (B, Cp, HW)    f32  channels on sublanes, flat spatial on lanes
    # w1_ref: (3Cp, 3Cp)     bf16 fused 3x3 weights: rows grouped by kw, cols by kh
    # b1_ref: (Cp, 1)        f32
    # w2_ref: (NCp, Cp)      bf16 1x1 weights [out, in]
    # b2_ref: (NCp, 1)       f32
    # o_ref : (B, NCp, HW)   f32
    B, Cp, HW = x_ref.shape
    L = B * HW
    inv_hw = 1.0 / hw

    # Global average pool + broadcast-add, per image; fold batch into lanes.
    ys = []
    for b in range(B):
        xb = x_ref[b]                                          # (Cp, HW) f32
        gmean = jnp.sum(xb, axis=1, keepdims=True) * inv_hw    # (Cp, 1)
        ys.append(xb + gmean)
    y = ys[0] if B == 1 else jnp.concatenate(ys, axis=1)       # (Cp, L) f32

    # Boundary masks generated in-kernel (no HBM mask input).
    pos = lax.broadcasted_iota(jnp.int32, (1, L), 1)
    pin = pos % hw                      # position within its own image
    col = pos % width                   # column within its row
    m_up = (pin >= width).astype(jnp.float32)        # row above exists  (dh=-1)
    m_dn = (pin < hw - width).astype(jnp.float32)    # row below exists  (dh=+1)
    m_lf = (col != 0).astype(jnp.float32)            # left neighbour    (dw=-1)
    m_rt = (col != width - 1).astype(jnp.float32)    # right neighbour   (dw=+1)

    # Two row-shifted copies (XLU) + row masks; stack along channels.
    y_up = pltpu.roll(y, width, axis=1) * m_up        # reads p - W
    y_dn = pltpu.roll(y, L - width, axis=1) * m_dn    # reads p + W
    ystack = jnp.concatenate([y_up, y, y_dn], axis=0)  # (3Cp, L), kh = 0,1,2

    # All nine taps as one bf16 MXU contraction with f32 accumulation.
    g = jnp.dot(w1_ref[...], ystack.astype(jnp.bfloat16),
                preferred_element_type=jnp.float32)    # (3Cp, L) f32
    g_lf = g[:Cp]             # kw=0 (dw=-1) group sum
    g_ct = g[Cp:2 * Cp]       # kw=1 (dw= 0)
    g_rt = g[2 * Cp:]         # kw=2 (dw=+1)

    # Column shift + wrap masks applied post-matmul (roll/mask commute with
    # the channel contraction since they act per lane).
    acc = (g_ct
           + pltpu.roll(g_lf, 1, axis=1) * m_lf
           + pltpu.roll(g_rt, L - 1, axis=1) * m_rt)

    h = jnp.maximum(acc + b1_ref[...], 0.0)            # bias + ReLU, f32

    out = jnp.dot(w2_ref[...], h.astype(jnp.bfloat16),
                  preferred_element_type=jnp.float32) + b2_ref[...]   # (NCp, L)

    for b in range(B):
        o_ref[b] = out[:, b * HW:(b + 1) * HW].astype(o_ref.dtype)


def final_head_pallas(x_nchw, w1_hwio, b1, w2_io, b2, *, images_per_block=None):
    """x_nchw: (N, C, H, W) float32 -> (N, NC, H, W) float32."""
    N, C, H, W = x_nchw.shape
    NC = w2_io.shape[1]
    HW = H * W
    Cp = _round_up(C, 8)
    NCp = _round_up(NC, 8)

    # NCHW -> (N, C, H*W): pure reshape; pad channels to a sublane multiple.
    x_flat = x_nchw.reshape(N, C, HW)
    if Cp != C:
        x_flat = jnp.pad(x_flat, ((0, 0), (0, Cp - C), (0, 0)))

    # Zero-pad weights / biases to (Cp, NCp); padded channels stay exactly zero
    # through pool, conv, ReLU and are sliced off after the call.
    w1p = jnp.pad(w1_hwio, ((0, 0), (0, 0), (0, Cp - C), (0, Cp - C)))
    b1p = jnp.pad(b1, (0, Cp - C)).reshape(Cp, 1).astype(jnp.float32)
    w2p = jnp.pad(w2_io, ((0, Cp - C), (0, NCp - NC)))
    b2p = jnp.pad(b2, (0, NCp - NC)).reshape(NCp, 1).astype(jnp.float32)

    # Fused 3x3 weight: rows grouped by kw (column offset), cols grouped by kh
    # (row offset), matching the in-kernel [y_up, y, y_dn] channel stack.
    w1_all = jnp.concatenate([
        jnp.concatenate([w1p[kh, kw].T for kh in range(3)], axis=1)  # (Cp, 3Cp)
        for kw in range(3)], axis=0).astype(jnp.bfloat16)             # (3Cp, 3Cp)
    w2_t = w2p.T.astype(jnp.bfloat16)                                 # (NCp, Cp)

    # Fold several images into one grid step (lanes = B*HW) to amortize the
    # ~0.35us per-step overhead, capped by a conservative VMEM working-set
    # budget so it stays safe on v7x's smaller VMEM.
    if images_per_block is None:
        per_image_bytes = HW * (48 * Cp + 16 * NCp)
        budget = 8 * 1024 * 1024
        images_per_block = max(1, min(N, budget // max(per_image_bytes, 1)))
    B = 1
    for cand in range(min(images_per_block, N), 0, -1):
        if N % cand == 0:
            B = cand
            break

    kernel = functools.partial(final_head_kernel, width=W, hw=HW)

    out_flat = pl.pallas_call(
        kernel,
        out_shape=jax.ShapeDtypeStruct((N, NCp, HW), jnp.float32),
        grid_spec=pltpu.PrefetchScalarGridSpec(
            num_scalar_prefetch=0,
            grid=(N // B,),
            in_specs=[
                pl.BlockSpec((B, Cp, HW), lambda n: (n, 0, 0)),
                pl.BlockSpec((3 * Cp, 3 * Cp), lambda n: (0, 0)),
                pl.BlockSpec((Cp, 1), lambda n: (0, 0)),
                pl.BlockSpec((NCp, Cp), lambda n: (0, 0)),
                pl.BlockSpec((NCp, 1), lambda n: (0, 0)),
            ],
            out_specs=pl.BlockSpec((B, NCp, HW), lambda n: (n, 0, 0)),
        ),
        compiler_params=pltpu.CompilerParams(
            dimension_semantics=("parallel",),
            vmem_limit_bytes=32 * 1024 * 1024),
    )(x_flat, w1_all, b1p, w2_t, b2p)

    # TODO(synk): for very large H*W (v7x 64 MiB VMEM), add a second grid axis
    # tiling HW into row blocks with a +/-W halo instead of whole-image blocks.

    # Drop channel padding; (N, NC, H*W) -> (N, NC, H, W) is a pure reshape.
    return out_flat[:, :NC, :].reshape(N, NC, H, W)


def final_head_reference(x_nchw, w1_hwio, b1, w2_io, b2):
    """Plain-JAX reference mirroring the PyTorch module."""
    x = jnp.transpose(x_nchw, (0, 2, 3, 1))                   # NHWC
    g = jnp.mean(x, axis=(1, 2), keepdims=True)
    y = x + g
    h = lax.conv_general_dilated(
        y, w1_hwio, window_strides=(1, 1), padding="SAME",
        dimension_numbers=("NHWC", "HWIO", "NHWC"),
        precision=lax.Precision.HIGHEST) + b1
    h = jnp.maximum(h, 0.0)
    w2_hwio = w2_io.reshape(1, 1, *w2_io.shape)
    o = lax.conv_general_dilated(
        h, w2_hwio, window_strides=(1, 1), padding="SAME",
        dimension_numbers=("NHWC", "HWIO", "NHWC"),
        precision=lax.Precision.HIGHEST) + b2
    return jnp.transpose(o, (0, 3, 1, 2))


if __name__ == "__main__":
    # Small shapes: batch=2, in_c=4, spatial=16x16, n_classes=3
    N, C, H, W, NC = 2, 4, 16, 16, 3

    key = jax.random.PRNGKey(0)
    kx, kw1, kb1, kw2, kb2 = jax.random.split(key, 5)

    x = jax.random.normal(kx, (N, C, H, W), dtype=jnp.float32)
    # Conv1: PyTorch weight (C, C, 3, 3) OIHW -> stored here as HWIO (3, 3, C, C)
    w1 = jax.random.normal(kw1, (3, 3, C, C), dtype=jnp.float32) * 0.1
    b1 = jax.random.normal(kb1, (C,), dtype=jnp.float32) * 0.1
    # Conv2: PyTorch weight (NC, C, 1, 1) -> stored here as (C, NC)
    w2 = jax.random.normal(kw2, (C, NC), dtype=jnp.float32) * 0.1
    b2 = jax.random.normal(kb2, (NC,), dtype=jnp.float32) * 0.1

    out = jax.block_until_ready(final_head_pallas(x, w1, b1, w2, b2))
    ref = jax.block_until_ready(final_head_reference(x, w1, b1, w2, b2))

    assert out.shape == (N, NC, H, W)
    # bf16 MXU operands with f32 accumulation -> relaxed tolerance vs f32 ref.
    err = float(jnp.max(jnp.abs(out - ref)))
    assert jnp.allclose(out, ref, atol=2e-2, rtol=2e-2), err

    print("KERNEL_OK")
</pallas_src>

<mosaic_0001>
module attributes {stable_mosaic.version = 11 : i64} {
  func.func @final_head_kernel(%arg0: i32, %arg1: memref<2x8x256xf32, #tpu.memory_space<vmem>>, %arg2: memref<24x24xbf16, #tpu.memory_space<vmem>>, %arg3: memref<8x1xf32, #tpu.memory_space<vmem>>, %arg4: memref<8x8xbf16, #tpu.memory_space<vmem>>, %arg5: memref<8x1xf32, #tpu.memory_space<vmem>>, %arg6: memref<2x8x256xf32, #tpu.memory_space<vmem>>) attributes {dimension_semantics = [#tpu.dimension_semantics<parallel>], iteration_bounds = array<i64: 1>, scalar_prefetch = 0 : i64, scratch_operands = 0 : i64, tpu.core_type = #tpu.core_type<tc>, window_params = [{transform_indices = @transform_0, window_bounds = array<i64: 2, 8, 256>}, {pipeline_mode = #tpu.pipeline_mode<synchronous>, transform_indices = @transform_1, window_bounds = array<i64: 24, 24>}, {pipeline_mode = #tpu.pipeline_mode<synchronous>, transform_indices = @transform_2, window_bounds = array<i64: 8, 1>}, {pipeline_mode = #tpu.pipeline_mode<synchronous>, transform_indices = @transform_3, window_bounds = array<i64: 8, 8>}, {pipeline_mode = #tpu.pipeline_mode<synchronous>, transform_indices = @transform_4, window_bounds = array<i64: 8, 1>}, {transform_indices = @transform_5, window_bounds = array<i64: 2, 8, 256>}]} {
    %c0 = arith.constant 0 : index
    %c0_0 = arith.constant 0 : index
    %c0_1 = arith.constant 0 : index
    %0 = vector.load %arg1[%c0, %c0_0, %c0_1] : memref<2x8x256xf32, #tpu.memory_space<vmem>>, vector<1x8x256xf32>
    %1 = vector.shape_cast %0 : vector<1x8x256xf32> to vector<8x256xf32>
    %cst = arith.constant dense<0.000000e+00> : vector<8xf32>
    %2 = vector.multi_reduction <add>, %1, %cst [1] : vector<8x256xf32> to vector<8xf32>
    %3 = vector.shape_cast %2 : vector<8xf32> to vector<8x1xf32>
    %cst_2 = arith.constant 3.906250e-03 : f32
    %4 = vector.broadcast %cst_2 : f32 to vector<8x1xf32>
    %5 = arith.mulf %3, %4 : vector<8x1xf32>
    %6 = vector.broadcast %5 : vector<8x1xf32> to vector<8x256xf32>
    %7 = arith.addf %1, %6 : vector<8x256xf32>
    %c1 = arith.constant 1 : index
    %c0_3 = arith.constant 0 : index
    %c0_4 = arith.constant 0 : index
    %8 = vector.load %arg1[%c1, %c0_3, %c0_4] : memref<2x8x256xf32, #tpu.memory_space<vmem>>, vector<1x8x256xf32>
    %9 = vector.shape_cast %8 : vector<1x8x256xf32> to vector<8x256xf32>
    %cst_5 = arith.constant dense<0.000000e+00> : vector<8xf32>
    %10 = vector.multi_reduction <add>, %9, %cst_5 [1] : vector<8x256xf32> to vector<8xf32>
    %11 = vector.shape_cast %10 : vector<8xf32> to vector<8x1xf32>
    %cst_6 = arith.constant 3.906250e-03 : f32
    %12 = vector.broadcast %cst_6 : f32 to vector<8x1xf32>
    %13 = arith.mulf %11, %12 : vector<8x1xf32>
    %14 = vector.broadcast %13 : vector<8x1xf32> to vector<8x256xf32>
    %15 = arith.addf %9, %14 : vector<8x256xf32>
    %16 = tpu.concatenate %7, %15 in 1 : vector<8x256xf32>, vector<8x256xf32> -> vector<8x512xf32>
    %17 = tpu.iota {dimensions = array<i32: 1>} : vector<1x512xi32>
    %c256_i32 = arith.constant 256 : i32
    %c0_i32 = arith.constant 0 : i32
    %18 = arith.cmpi eq, %c256_i32, %c0_i32 : i32
    %c1_i32 = arith.constant 1 : i32
    %19 = arith.select %18, %c1_i32, %c256_i32 : i32
    %20 = vector.broadcast %19 : i32 to vector<1x512xi32>
    %21 = arith.remsi %17, %20 : vector<1x512xi32>
    %c0_i32_7 = arith.constant 0 : i32
    %22 = vector.broadcast %c0_i32_7 : i32 to vector<1x512xi32>
    %23 = arith.cmpi ne, %21, %22 : vector<1x512xi32>
    %c0_i32_8 = arith.constant 0 : i32
    %24 = vector.broadcast %c0_i32_8 : i32 to vector<1x512xi32>
    %25 = arith.cmpi slt, %21, %24 : vector<1x512xi32>
    %c0_i32_9 = arith.constant 0 : i32
    %26 = arith.cmpi slt, %19, %c0_i32_9 : i32
    %27 = vector.broadcast %26 : i1 to vector<1x512xi1>
    %28 = vector.broadcast %27 : vector<1x512xi1> to vector<1x512xi1>
    %29 = arith.xori %25, %28 : vector<1x512xi1>
    %30 = arith.andi %29, %23 : vector<1x512xi1>
    %31 = vector.broadcast %19 : i32 to vector<1x512xi32>
    %32 = arith.addi %21, %31 : vector<1x512xi32>
    %33 = arith.select %30, %32, %21 : vector<1x512xi1>, vector<1x512xi32>
    %c16_i32 = arith.constant 16 : i32
    %c0_i32_10 = arith.constant 0 : i32
    %34 = arith.cmpi eq, %c16_i32, %c0_i32_10 : i32
    %c1_i32_11 = arith.constant 1 : i32
    %35 = arith.select %34, %c1_i32_11, %c16_i32 : i32
    %36 = vector.broadcast %35 : i32 to vector<1x512xi32>
    %37 = arith.remsi %17, %36 : vector<1x512xi32>
    %c0_i32_12 = arith.constant 0 : i32
    %38 = vector.broadcast %c0_i32_12 : i32 to vector<1x512xi32>
    %39 = arith.cmpi ne, %37, %38 : vector<1x512xi32>
    %c0_i32_13 = arith.constant 0 : i32
    %40 = vector.broadcast %c0_i32_13 : i32 to vector<1x512xi32>
    %41 = arith.cmpi slt, %37, %40 : vector<1x512xi32>
    %c0_i32_14 = arith.constant 0 : i32
    %42 = arith.cmpi slt, %35, %c0_i32_14 : i32
    %43 = vector.broadcast %42 : i1 to vector<1x512xi1>
    %44 = vector.broadcast %43 : vector<1x512xi1> to vector<1x512xi1>
    %45 = arith.xori %41, %44 : vector<1x512xi1>
    %46 = arith.andi %45, %39 : vector<1x512xi1>
    %47 = vector.broadcast %35 : i32 to vector<1x512xi32>
    %48 = arith.addi %37, %47 : vector<1x512xi32>
    %49 = arith.select %46, %48, %37 : vector<1x512xi1>, vector<1x512xi32>
    %c16_i32_15 = arith.constant 16 : i32
    %50 = vector.broadcast %c16_i32_15 : i32 to vector<1x512xi32>
    %51 = arith.cmpi sge, %33, %50 : vector<1x512xi32>
    %52 = arith.extui %51 : vector<1x512xi1> to vector<1x512xi32>
    %53 = arith.sitofp %52 : vector<1x512xi32> to vector<1x512xf32>
    %c240_i32 = arith.constant 240 : i32
    %54 = vector.broadcast %c240_i32 : i32 to vector<1x512xi32>
    %55 = arith.cmpi slt, %33, %54 : vector<1x512xi32>
    %56 = arith.extui %55 : vector<1x512xi1> to vector<1x512xi32>
    %57 = arith.sitofp %56 : vector<1x512xi32> to vector<1x512xf32>
    %c0_i32_16 = arith.constant 0 : i32
    %58 = vector.broadcast %c0_i32_16 : i32 to vector<1x512xi32>
    %59 = arith.cmpi ne, %49, %58 : vector<1x512xi32>
    %60 = arith.extui %59 : vector<1x512xi1> to vector<1x512xi32>
    %61 = arith.sitofp %60 : vector<1x512xi32> to vector<1x512xf32>
    %c15_i32 = arith.constant 15 : i32
    %62 = vector.broadcast %c15_i32 : i32 to vector<1x512xi32>
    %63 = arith.cmpi ne, %49, %62 : vector<1x512xi32>
    %64 = arith.extui %63 : vector<1x512xi1> to vector<1x512xi32>
    %65 = arith.sitofp %64 : vector<1x512xi32> to vector<1x512xf32>
    %c16_i32_17 = arith.constant 16 : i32
    %66 = tpu.dynamic_rotate %16 by %c16_i32_17 dim 1 : vector<8x512xf32>, i32 -> vector<8x512xf32>
    %67 = vector.broadcast %53 : vector<1x512xf32> to vector<8x512xf32>
    %68 = arith.mulf %66, %67 : vector<8x512xf32>
    %c496_i32 = arith.constant 496 : i32
    %69 = tpu.dynamic_rotate %16 by %c496_i32 dim 1 : vector<8x512xf32>, i32 -> vector<8x512xf32>
    %70 = vector.broadcast %57 : vector<1x512xf32> to vector<8x512xf32>
    %71 = arith.mulf %69, %70 : vector<8x512xf32>
    %72 = tpu.concatenate %68, %16, %71 in 0 : vector<8x512xf32>, vector<8x512xf32>, vector<8x512xf32> -> vector<24x512xf32>
    %c0_18 = arith.constant 0 : index
    %c0_19 = arith.constant 0 : index
    %73 = vector.load %arg2[%c0_18, %c0_19] : memref<24x24xbf16, #tpu.memory_space<vmem>>, vector<24x24xbf16>
    %74 = arith.truncf %72 : vector<24x512xf32> to vector<24x512xbf16>
    %cst_20 = arith.constant dense<0.000000e+00> : vector<24x512xf32>
    %75 = tpu.matmul %73, %74, %cst_20 {dimension_numbers = #tpu.dot_dimension_numbers<[1], [0], [0], [1], [0, 0, 1, 1], [], []>} : vector<24x24xbf16>, vector<24x512xbf16>, vector<24x512xf32> -> vector<24x512xf32>
    %76 = vector.extract_strided_slice %75 {offsets = [0, 0], sizes = [8, 512], strides = [1, 1]} : vector<24x512xf32> to vector<8x512xf32>
    %77 = vector.extract_strided_slice %75 {offsets = [8, 0], sizes = [8, 512], strides = [1, 1]} : vector<24x512xf32> to vector<8x512xf32>
    %78 = vector.extract_strided_slice %75 {offsets = [16, 0], sizes = [8, 512], strides = [1, 1]} : vector<24x512xf32> to vector<8x512xf32>
    %c1_i32_21 = arith.constant 1 : i32
    %79 = tpu.dynamic_rotate %76 by %c1_i32_21 dim 1 : vector<8x512xf32>, i32 -> vector<8x512xf32>
    %80 = vector.broadcast %61 : vector<1x512xf32> to vector<8x512xf32>
    %81 = arith.mulf %79, %80 : vector<8x512xf32>
    %82 = arith.addf %77, %81 : vector<8x512xf32>
    %c511_i32 = arith.constant 511 : i32
    %83 = tpu.dynamic_rotate %78 by %c511_i32 dim 1 : vector<8x512xf32>, i32 -> vector<8x512xf32>
    %84 = vector.broadcast %65 : vector<1x512xf32> to vector<8x512xf32>
    %85 = arith.mulf %83, %84 : vector<8x512xf32>
    %86 = arith.addf %82, %85 : vector<8x512xf32>
    %c0_22 = arith.constant 0 : index
    %c0_23 = arith.constant 0 : index
    %87 = vector.load %arg3[%c0_22, %c0_23] : memref<8x1xf32, #tpu.memory_space<vmem>>, vector<8x1xf32>
    %88 = vector.broadcast %87 : vector<8x1xf32> to vector<8x512xf32>
    %89 = arith.addf %86, %88 : vector<8x512xf32>
    %cst_24 = arith.constant 0.000000e+00 : f32
    %90 = vector.broadcast %cst_24 : f32 to vector<8x512xf32>
    %91 = arith.maximumf %89, %90 : vector<8x512xf32>
    %c0_25 = arith.constant 0 : index
    %c0_26 = arith.constant 0 : index
    %92 = vector.load %arg4[%c0_25, %c0_26] : memref<8x8xbf16, #tpu.memory_space<vmem>>, vector<8x8xbf16>
    %93 = arith.truncf %91 : vector<8x512xf32> to vector<8x512xbf16>
    %cst_27 = arith.constant dense<0.000000e+00> : vector<8x512xf32>
    %94 = tpu.matmul %92, %93, %cst_27 {dimension_numbers = #tpu.dot_dimension_numbers<[1], [0], [0], [1], [0, 0, 1, 1], [], []>} : vector<8x8xbf16>, vector<8x512xbf16>, vector<8x512xf32> -> vector<8x512xf32>
    %c0_28 = arith.constant 0 : index
    %c0_29 = arith.constant 0 : index
    %95 = vector.load %arg5[%c0_28, %c0_29] : memref<8x1xf32, #tpu.memory_space<vmem>>, vector<8x1xf32>
    %96 = vector.broadcast %95 : vector<8x1xf32> to vector<8x512xf32>
    %97 = arith.addf %94, %96 : vector<8x512xf32>
    %98 = vector.extract_strided_slice %97 {offsets = [0, 0], sizes = [8, 256], strides = [1, 1]} : vector<8x512xf32> to vector<8x256xf32>
    %c0_30 = arith.constant 0 : index
    %c0_31 = arith.constant 0 : index
    %c0_32 = arith.constant 0 : index
    %99 = vector.load %arg6[%c0_30, %c0_31, %c0_32] : memref<2x8x256xf32, #tpu.memory_space<vmem>>, vector<1x8x256xf32>
    %100 = vector.shape_cast %99 : vector<1x8x256xf32> to vector<8x256xf32>
    %101 = vector.shape_cast %98 : vector<8x256xf32> to vector<1x8x256xf32>
    tpu.vector_store %arg6[%c0_30, %c0_31, %c0_32], %101 {strides = array<i32>} : memref<2x8x256xf32, #tpu.memory_space<vmem>>, vector<1x8x256xf32>,
    %102 = vector.extract_strided_slice %97 {offsets = [0, 256], sizes = [8, 256], strides = [1, 1]} : vector<8x512xf32> to vector<8x256xf32>
    %c1_33 = arith.constant 1 : index
    %c0_34 = arith.constant 0 : index
    %c0_35 = arith.constant 0 : index
    %103 = vector.load %arg6[%c1_33, %c0_34, %c0_35] : memref<2x8x256xf32, #tpu.memory_space<vmem>>, vector<1x8x256xf32>
    %104 = vector.shape_cast %103 : vector<1x8x256xf32> to vector<8x256xf32>
    %105 = vector.shape_cast %102 : vector<8x256xf32> to vector<1x8x256xf32>
    tpu.vector_store %arg6[%c1_33, %c0_34, %c0_35], %105 {strides = array<i32>} : memref<2x8x256xf32, #tpu.memory_space<vmem>>, vector<1x8x256xf32>,
    return
  }
  func.func @transform_0(%arg0: i32) -> (i32, i32, i32) {
    %c0_i32 = arith.constant 0 : i32
    %c0_i32_0 = arith.constant 0 : i32
    %c0_i32_1 = arith.constant 0 : i32
    return %arg0, %c0_i32, %c0_i32_0 : i32, i32, i32
  }
  func.func @transform_1(%arg0: i32) -> (i32, i32) {
    %c0_i32 = arith.constant 0 : i32
    %c0_i32_0 = arith.constant 0 : i32
    %c0_i32_1 = arith.constant 0 : i32
    return %c0_i32, %c0_i32_0 : i32, i32
  }
  func.func @transform_2(%arg0: i32) -> (i32, i32) {
    %c0_i32 = arith.constant 0 : i32
    %c0_i32_0 = arith.constant 0 : i32
    %c0_i32_1 = arith.constant 0 : i32
    return %c0_i32, %c0_i32_0 : i32, i32
  }
  func.func @transform_3(%arg0: i32) -> (i32, i32) {
    %c0_i32 = arith.constant 0 : i32
    %c0_i32_0 = arith.constant 0 : i32
    %c0_i32_1 = arith.constant 0 : i32
    return %c0_i32, %c0_i32_0 : i32, i32
  }
  func.func @transform_4(%arg0: i32) -> (i32, i32) {
    %c0_i32 = arith.constant 0 : i32
    %c0_i32_0 = arith.constant 0 : i32
    %c0_i32_1 = arith.constant 0 : i32
    return %c0_i32, %c0_i32_0 : i32, i32
  }
  func.func @transform_5(%arg0: i32) -> (i32, i32, i32) {
    %c0_i32 = arith.constant 0 : i32
    %c0_i32_0 = arith.constant 0 : i32
    %c0_i32_1 = arith.constant 0 : i32
    return %arg0, %c0_i32, %c0_i32_0 : i32, i32, i32
  }
}

</mosaic_0001>

<llo_original>
// kernel: tpu_custom_call.1
$region0: #{tpu_custom_call.1}
  #allocation0 [shape = 'u32[]', space=smem, size = 0x4, offset = 0x4, fixed_abs, tag = 'smem constant byte address 0x4 - core index']
  #allocation1 [shape = 'u32[72,128]{1,0:T(1,128)}', space=vmem, size = 0x9000, scoped, tag = 'internal scratch']
  %s0 = inlined_call_operand.hbm [shape: f32[2,8,256], index: 0, kind: input, shape index: {}]
  %s1 = inlined_call_operand.vmem [shape: bf16[24,24], index: 1, kind: input, shape index: {}]
  %s2 = inlined_call_operand.vmem [shape: f32[8,1], index: 2, kind: input, shape index: {}]
  %s3 = inlined_call_operand.vmem [shape: bf16[8,8], index: 3, kind: input, shape index: {}]
  %s4 = inlined_call_operand.vmem [shape: f32[8,1], index: 4, kind: input, shape index: {}]
  %s5 = inlined_call_operand.hbm [shape: f32[2,8,256], index: 5, kind: output, shape index: {}]
  %s6 = sld [smem:[#allocation0]]
  $region34: #{tpu_custom_call.1} parent=0
    _
  %s8 = ssub.s32 1, %s6
  %s9 = scalar_select 0, %s8, %s6
  $region1: #{tpu_custom_call.1} parent=0
    #allocation2 [shape = 'u8[16384]{0}', space=vmem, size = 0x4000, scoped, tag = 'input window, operand 0, single buffered']
    #allocation3 [shape = 's32[1]{0}', space=sflag, size = 0x4, scoped, tag = 'scoped memory for tpu_custom_call.1']
    #allocation4 [shape = 's32[1]{0}', space=sflag, size = 0x4, scoped, tag = 'scoped memory for tpu_custom_call.1']
    #allocation5 [shape = 'u8[16384]{0}', space=vmem, size = 0x4000, scoped, tag = 'output window, operand 0, single buffered']
    %10 = vsyncpa [#allocation3], 0
    %11 = vsyncpa [#allocation4], 0
    // Predicated region
    $region2: #{tpu_custom_call.1} parent=1 // pred_check
      _
    $region3: #{tpu_custom_call.1} parent=1 // pred_check_branch
      %13 = sbr.rel (0) target = $region5
    $region4: #{tpu_custom_call.1} parent=1 // pred_region
      %15 = vsyncadd [#allocation3], 0
      %s16 = sshll.u32 %s0, 4
      %s17 = int_to_ptr.hbm [resolvable:$true] %s16
      %s18 = sshll.u32 [#allocation2], 4
      %s19 = int_to_ptr.vmem [resolvable:$true] %s18
      %24 = dma.hbm_to_vmem [thread:$0]  %s17, 512, %s19, [#allocation3], 256, 256, 16
    $region5: #{tpu_custom_call.1} parent=1 // pred_fallthru
      _
    // Predicated region
    $region6: #{tpu_custom_call.1} parent=1 // pred_check
      _
    $region7: #{tpu_custom_call.1} parent=1 // pred_check_branch
      %26 = sbr.rel (0) target = $region9
    $region8: #{tpu_custom_call.1} parent=1 // pred_region
      _
    $region9: #{tpu_custom_call.1} parent=1 // pred_fallthru
      _
    // Predicated region
    $region10: #{tpu_custom_call.1} parent=1 // pred_check
      _
    $region11: #{tpu_custom_call.1} parent=1 // pred_check_branch
      %28 = sbr.rel (0) target = $region13
    $region12: #{tpu_custom_call.1} parent=1 // pred_region
      _
    $region13: #{tpu_custom_call.1} parent=1 // pred_fallthru
      _
    // Predicated region
    $region14: #{tpu_custom_call.1} parent=1 // pred_check
      _
    $region15: #{tpu_custom_call.1} parent=1 // pred_check_branch
      %30 = sbr.rel (0) target = $region17
    $region16: #{tpu_custom_call.1} parent=1 // pred_region
      _
    $region17: #{tpu_custom_call.1} parent=1 // pred_fallthru
      _
    // Predicated region
    $region18: #{tpu_custom_call.1} parent=1 // pred_check
      _
    $region19: #{tpu_custom_call.1} parent=1 // pred_check_branch
      %32 = sbr.rel (0) target = $region21
    $region20: #{tpu_custom_call.1} parent=1 // pred_region
      _
    $region21: #{tpu_custom_call.1} parent=1 // pred_fallthru
      _
    // Predicated region
    $region22: #{tpu_custom_call.1} parent=1 // pred_check
      _
    $region23: #{tpu_custom_call.1} parent=1 // pred_check_branch
      %34 = sbr.rel (0) target = $region25
    $region24: #{tpu_custom_call.1} parent=1 // pred_region
      %36 = dma.done [#allocation3], 512
    $region25: #{tpu_custom_call.1} parent=1 // pred_fallthru
      _
    %v38 = vld [vmem:[#allocation2] sm:$0xff]
    %v39 = vld [vmem:[#allocation2 + $0x8] sm:$0xff]
    %v40 = vadd.f32 %v38, %v39
    %41 = vadd.xlane.f32.xlu0 %v40
    %v42 = vpop.xlane.xlu0 %41
    %v43 = vmul.f32 %v42, 0.00390625
    %v44 = vadd.f32 %v38, %v43
    %v45 = vadd.f32 %v39, %v43
    %s46 = scalar_lea.vmem [#allocation2], 16
    %v47 = vld [vmem:[%s46] sm:$0xff]
    %v48 = vld [vmem:[%s46 + $0x8] sm:$0xff]
    %v49 = vadd.f32 %v47, %v48
    %50 = vadd.xlane.f32.xlu0 %v49
    %v51 = vpop.xlane.xlu0 %50
    %v52 = vmul.f32 %v51, 0.00390625
    %v53 = vadd.f32 %v47, %v52
    %v54 = vadd.f32 %v48, %v52
    %v55 = vlaneseq
    %v56 = vand.u32 %v55, 127
    %v57 = vadd.s32 %v56, 128
    %v58 = vadd.s32 %v56, 256
    %v59 = vadd.s32 %v56, 384
    %vm60 = vcmp.lt.s32.totalorder %v56, 0
    %v61 = vsub.s32 0, %v56
    %v62 = vsel %vm60, %v61, %v56
    %v63 = vshrl.u32 %v62, 8
    %v64 = vand.u32 %v62, 255
    %v65 = vsub.s32 0, %v64
    %v66 = vsel %vm60, %v65, %v64
    %vm67 = vcmp.lt.s32.totalorder %v57, 0
    %v68 = vsub.s32 0, %v57
    %v69 = vsel %vm67, %v68, %v57
    %v70 = vshrl.u32 %v69, 8
    %v71 = vand.u32 %v69, 255
    %v72 = vsub.s32 0, %v71
    %v73 = vsel %vm67, %v72, %v71
    %vm74 = vcmp.lt.s32.totalorder %v58, 0
    %v75 = vsub.s32 0, %v58
    %v76 = vsel %vm74, %v75, %v58
    %v77 = vshrl.u32 %v76, 8
    %v78 = vand.u32 %v76, 255
    %v79 = vsub.s32 0, %v78
    %v80 = vsel %vm74, %v79, %v78
    %vm81 = vcmp.lt.s32.totalorder %v59, 0
    %v82 = vsub.s32 0, %v59
    %v83 = vsel %vm81, %v82, %v59
    %v84 = vshrl.u32 %v83, 8
    %v85 = vand.u32 %v83, 255
    %v86 = vsub.s32 0, %v85
    %v87 = vsel %vm81, %v86, %v85
    %vm88 = vcmp.ne.s32.totalorder %v66, 0
    %vm89 = vcmp.ne.s32.totalorder %v73, 0
    %vm90 = vcmp.ne.s32.totalorder %v80, 0
    %vm91 = vcmp.ne.s32.totalorder %v87, 0
    %vm92 = vcmp.lt.s32.totalorder %v66, 0
    %vm93 = vcmp.lt.s32.totalorder %v73, 0
    %vm94 = vcmp.lt.s32.totalorder %v80, 0
    %vm95 = vcmp.lt.s32.totalorder %v87, 0
    %vm96 = vmand %vm92, %vm88
    %vm97 = vmand %vm93, %vm89
    %vm98 = vmand %vm94, %vm90
    %vm99 = vmand %vm95, %vm91
    %v100 = vadd.s32 %v66, 256
    %v101 = vadd.s32 %v73, 256
    %v102 = vadd.s32 %v80, 256
    %v103 = vadd.s32 %v87, 256
    %v104 = vsel %vm96, %v100, %v66
    %v105 = vsel %vm97, %v101, %v73
    %v106 = vsel %vm98, %v102, %v80
    %v107 = vsel %vm99, %v103, %v87
    %vm108 = vcmp.lt.s32.totalorder %v56, 0
    %v109 = vsub.s32 0, %v56
    %v110 = vsel %vm108, %v109, %v56
    %v111 = vshrl.u32 %v110, 4
    %v112 = vand.u32 %v110, 15
    %v113 = vsub.s32 0, %v112
    %v114 = vsel %vm108, %v113, %v112
    %vm115 = vcmp.lt.s32.totalorder %v57, 0
    %v116 = vsub.s32 0, %v57
    %v117 = vsel %vm115, %v116, %v57
    %v118 = vshrl.u32 %v117, 4
    %v119 = vand.u32 %v117, 15
    %v120 = vsub.s32 0, %v119
    %v121 = vsel %vm115, %v120, %v119
    %vm122 = vcmp.lt.s32.totalorder %v58, 0
    %v123 = vsub.s32 0, %v58
    %v124 = vsel %vm122, %v123, %v58
    %v125 = vshrl.u32 %v124, 4
    %v126 = vand.u32 %v124, 15
    %v127 = vsub.s32 0, %v126
    %v128 = vsel %vm122, %v127, %v126
    %vm129 = vcmp.lt.s32.totalorder %v59, 0
    %v130 = vsub.s32 0, %v59
    %v131 = vsel %vm129, %v130, %v59
    %v132 = vshrl.u32 %v131, 4
    %v133 = vand.u32 %v131, 15
    %v134 = vsub.s32 0, %v133
    %v135 = vsel %vm129, %v134, %v133
    %vm136 = vcmp.ne.s32.totalorder %v114, 0
    %vm137 = vcmp.ne.s32.totalorder %v121, 0
    %vm138 = vcmp.ne.s32.totalorder %v128, 0
    %vm139 = vcmp.ne.s32.totalorder %v135, 0
    %vm140 = vcmp.lt.s32.totalorder %v114, 0
    %vm141 = vcmp.lt.s32.totalorder %v121, 0
    %vm142 = vcmp.lt.s32.totalorder %v128, 0
    %vm143 = vcmp.lt.s32.totalorder %v135, 0
    %vm144 = vmand %vm140, %vm136
    %vm145 = vmand %vm141, %vm137
    %vm146 = vmand %vm142, %vm138
    %vm147 = vmand %vm143, %vm139
    %v148 = vadd.s32 %v114, 16
    %v149 = vadd.s32 %v121, 16
    %v150 = vadd.s32 %v128, 16
    %v151 = vadd.s32 %v135, 16
    %v152 = vsel %vm144, %v148, %v114
    %v153 = vsel %vm145, %v149, %v121
    %v154 = vsel %vm146, %v150, %v128
    %v155 = vsel %vm147, %v151, %v135
    %vm156 = vcmp.ge.s32.totalorder %v104, 16
    %vm157 = vcmp.ge.s32.totalorder %v105, 16
    %vm158 = vcmp.ge.s32.totalorder %v106, 16
    %vm159 = vcmp.ge.s32.totalorder %v107, 16
    %v160 = vsel %vm156, 1, 0
    %v161 = vsel %vm157, 1, 0
    %v162 = vsel %vm158, 1, 0
    %v163 = vsel %vm159, 1, 0
    %v164 = vcvt.s32.f32 %v160
    %v165 = vcvt.s32.f32 %v161
    %v166 = vcvt.s32.f32 %v162
    %v167 = vcvt.s32.f32 %v163
    %vm168 = vcmp.lt.s32.totalorder %v104, 240
    %vm169 = vcmp.lt.s32.totalorder %v105, 240
    %vm170 = vcmp.lt.s32.totalorder %v106, 240
    %vm171 = vcmp.lt.s32.totalorder %v107, 240
    %v172 = vsel %vm168, 1, 0
    %v173 = vsel %vm169, 1, 0
    %v174 = vsel %vm170, 1, 0
    %v175 = vsel %vm171, 1, 0
    %v176 = vcvt.s32.f32 %v172
    %v177 = vcvt.s32.f32 %v173
    %v178 = vcvt.s32.f32 %v174
    %v179 = vcvt.s32.f32 %v175
    %vm180 = vcmp.ne.s32.totalorder %v152, 0
    %vm181 = vcmp.ne.s32.totalorder %v153, 0
    %vm182 = vcmp.ne.s32.totalorder %v154, 0
    %vm183 = vcmp.ne.s32.totalorder %v155, 0
    %v184 = vsel %vm180, 1, 0
    %v185 = vsel %vm181, 1, 0
    %v186 = vsel %vm182, 1, 0
    %v187 = vsel %vm183, 1, 0
    %v188 = vcvt.s32.f32 %v184
    %v189 = vcvt.s32.f32 %v185
    %v190 = vcvt.s32.f32 %v186
    %v191 = vcvt.s32.f32 %v187
    %vm192 = vcmp.ne.s32.totalorder %v152, 15
    %vm193 = vcmp.ne.s32.totalorder %v153, 15
    %vm194 = vcmp.ne.s32.totalorder %v154, 15
    %vm195 = vcmp.ne.s32.totalorder %v155, 15
    %v196 = vsel %vm192, 1, 0
    %v197 = vsel %vm193, 1, 0
    %v198 = vsel %vm194, 1, 0
    %v199 = vsel %vm195, 1, 0
    %v200 = vcvt.s32.f32 %v196
    %v201 = vcvt.s32.f32 %v197
    %v202 = vcvt.s32.f32 %v198
    %v203 = vcvt.s32.f32 %v199
    %204 = vrot.lane.b32.xlu0 %v44, 16
    %v205 = vpop.permute.xlu0 %204
    %206 = vrot.lane.b32.xlu0 %v45, 16
    %v207 = vpop.permute.xlu0 %206
    %208 = vrot.lane.b32.xlu0 %v53, 16
    %v209 = vpop.permute.xlu0 %208
    %210 = vrot.lane.b32.xlu0 %v54, 16
    %v211 = vpop.permute.xlu0 %210
    %vm212 = vcmp.lt.s32.totalorder %v56, 16
    %v213 = vsel %vm212, %v209, %v211
    %v214 = vsel %vm212, %v207, %v209
    %v215 = vsel %vm212, %v205, %v207
    %v216 = vsel %vm212, %v211, %v205
    %v217 = vmul.f32 %v216, %v164
    %v218 = vmul.f32 %v215, %v165
    %v219 = vmul.f32 %v214, %v166
    %v220 = vmul.f32 %v213, %v167
    %221 = vrot.lane.b32.xlu0 %v44, 112
    %v222 = vpop.permute.xlu0 %221
    %223 = vrot.lane.b32.xlu0 %v45, 112
    %v224 = vpop.permute.xlu0 %223
    %225 = vrot.lane.b32.xlu0 %v53, 112
    %v226 = vpop.permute.xlu0 %225
    %227 = vrot.lane.b32.xlu0 %v54, 112
    %v228 = vpop.permute.xlu0 %227
    %vm229 = vcmp.lt.s32.totalorder %v56, 112
    %v230 = vsel %vm229, %v226, %v228
    %v231 = vsel %vm229, %v224, %v226
    %v232 = vsel %vm229, %v222, %v224
    %v233 = vsel %vm229, %v228, %v222
    %v234 = vmul.f32 %v232, %v176
    %v235 = vmul.f32 %v231, %v177
    %v236 = vmul.f32 %v230, %v178
    %v237 = vmul.f32 %v233, %v179
    %v238 = vld [vmem:[%s1] sm:$0xf]
    %v239 = vld [vmem:[%s1 + $0x4] sm:$0xf]
    %v240 = vld [vmem:[%s1 + $0x8] sm:$0xf]
    %v241 = vpack.c.bf16 %v44, %v217
    %v242 = vpack.c.bf16 %v45, %v218
    %v243 = vpack.c.bf16 %v53, %v219
    %v244 = vpack.c.bf16 %v54, %v220
    %v245 = vpack.c.bf16 %v234, %v234
    %v246 = vpack.c.bf16 %v235, %v235
    %v247 = vpack.c.bf16 %v236, %v236
    %v248 = vpack.c.bf16 %v237, %v237
    %v252 = vunpack.c.l.b16 %v238
    %v253 = vunpack.c.l.b16 %v239
    %v254 = vunpack.c.l.b16 %v240
    %v255 = vpack.c.b16 %v253, %v252
    %v256 = vpack.c.b16 %v254, %v254
    %vm257 = vcmask 195584
    %v259 = vsel %vm257, %v255, 0
    %v262 = vsel %vm257, %v256, 0
    %vm264 = vcmask 1043456
    %v266 = vsel %vm264, %v245, 0
    %v269 = vsel %vm264, %v246, 0
    %v272 = vsel %vm264, %v247, 0
    %v275 = vsel %vm264, %v248, 0
    %277 = vmatpush.bf16.msra.mxu0 0
    %278 = vmatpush.bf16.msra.mxu0 0
    %279 = vmatpush.bf16.msra.mxu0 0
    %280 = vmatpush.bf16.msra.mxu0 0
    %281 = vmatpush.bf16.msra.mxu0 0
    %282 = vmatpush.bf16.msra.mxu0 0
    %283 = vmatpush.bf16.msra.mxu0 %v266
    %284 = vmatpush.bf16.msra.mxu0 %v241
    %285 = vmatmul.bf16.gmra.mxu0 %v259
    %v286 = vpop.f32.mrf.mxu0
    %v287 = vadd.f32 0.0, %v286
    %v288 = vpop.f32.mrf.mxu0
    %v289 = vadd.f32 0.0, %v288
    %290 = vmatmul.bf16.gmra.mxu0 %v262
    %v291 = vpop.f32.mrf.mxu0
    %v292 = vadd.f32 0.0, %v291
    %v293 = vpop.f32.mrf.mxu0
    %294 = vdwg.mxu0
    %295 = vmatpush.bf16.msra.mxu0 0
    %296 = vmatpush.bf16.msra.mxu0 0
    %297 = vmatpush.bf16.msra.mxu0 0
    %298 = vmatpush.bf16.msra.mxu0 0
    %299 = vmatpush.bf16.msra.mxu0 0
    %300 = vmatpush.bf16.msra.mxu0 0
    %301 = vmatpush.bf16.msra.mxu0 %v269
    %302 = vmatpush.bf16.msra.mxu0 %v242
    %303 = vmatmul.bf16.gmra.mxu0 %v259
    %v304 = vpop.f32.mrf.mxu0
    %v305 = vadd.f32 0.0, %v304
    %v306 = vpop.f32.mrf.mxu0
    %v307 = vadd.f32 0.0, %v306
    %308 = vmatmul.bf16.gmra.mxu0 %v262
    %v309 = vpop.f32.mrf.mxu0
    %v310 = vadd.f32 0.0, %v309
    %v311 = vpop.f32.mrf.mxu0
    %312 = vdwg.mxu0
    %313 = vmatpush.bf16.msra.mxu0 0
    %314 = vmatpush.bf16.msra.mxu0 0
    %315 = vmatpush.bf16.msra.mxu0 0
    %316 = vmatpush.bf16.msra.mxu0 0
    %317 = vmatpush.bf16.msra.mxu0 0
    %318 = vmatpush.bf16.msra.mxu0 0
    %319 = vmatpush.bf16.msra.mxu0 %v272
    %320 = vmatpush.bf16.msra.mxu0 %v243
    %321 = vmatmul.bf16.gmra.mxu0 %v259
    %v322 = vpop.f32.mrf.mxu0
    %v323 = vadd.f32 0.0, %v322
    %v324 = vpop.f32.mrf.mxu0
    %v325 = vadd.f32 0.0, %v324
    %326 = vmatmul.bf16.gmra.mxu0 %v262
    %v327 = vpop.f32.mrf.mxu0
    %v328 = vadd.f32 0.0, %v327
    %v329 = vpop.f32.mrf.mxu0
    %330 = vdwg.mxu0
    %331 = vmatpush.bf16.msra.mxu0 0
    %332 = vmatpush.bf16.msra.mxu0 0
    %333 = vmatpush.bf16.msra.mxu0 0
    %334 = vmatpush.bf16.msra.mxu0 0
    %335 = vmatpush.bf16.msra.mxu0 0
    %336 = vmatpush.bf16.msra.mxu0 0
    %337 = vmatpush.bf16.msra.mxu0 %v275
    %338 = vmatpush.bf16.msra.mxu0 %v244
    %339 = vmatmul.bf16.gmra.mxu0 %v259
    %v340 = vpop.f32.mrf.mxu0
    %v341 = vadd.f32 0.0, %v340
    %v342 = vpop.f32.mrf.mxu0
    %v343 = vadd.f32 0.0, %v342
    %344 = vmatmul.bf16.gmra.mxu0 %v262
    %v345 = vpop.f32.mrf.mxu0
    %v346 = vadd.f32 0.0, %v345
    %v347 = vpop.f32.mrf.mxu0
    %348 = vdwg.mxu0
    %349 = vrot.lane.b32.xlu0 %v287, 1
    %v350 = vpop.permute.xlu0 %349
    %351 = vrot.lane.b32.xlu0 %v305, 1
    %v352 = vpop.permute.xlu0 %351
    %353 = vrot.lane.b32.xlu0 %v323, 1
    %v354 = vpop.permute.xlu0 %353
    %355 = vrot.lane.b32.xlu0 %v341, 1
    %v356 = vpop.permute.xlu0 %355
    %vm357 = vcmp.lt.s32.totalorder %v56, 1
    %v358 = vsel %vm357, %v354, %v356
    %v359 = vsel %vm357, %v352, %v354
    %v360 = vsel %vm357, %v350, %v352
    %v361 = vsel %vm357, %v356, %v350
    %v362 = vmul.f32 %v361, %v188
    %v363 = vmul.f32 %v360, %v189
    %v364 = vmul.f32 %v359, %v190
    %v365 = vmul.f32 %v358, %v191
    %v366 = vadd.f32 %v289, %v362
    %v367 = vadd.f32 %v307, %v363
    %v368 = vadd.f32 %v325, %v364
    %v369 = vadd.f32 %v343, %v365
    %370 = vrot.lane.b32.xlu0 %v292, 127
    %v371 = vpop.permute.xlu0 %370
    %372 = vrot.lane.b32.xlu0 %v310, 127
    %v373 = vpop.permute.xlu0 %372
    %374 = vrot.lane.b32.xlu0 %v328, 127
    %v375 = vpop.permute.xlu0 %374
    %376 = vrot.lane.b32.xlu0 %v346, 127
    %v377 = vpop.permute.xlu0 %376
    %vm378 = vcmp.lt.s32.totalorder %v56, 127
    %v379 = vsel %vm378, %v375, %v377
    %v380 = vsel %vm378, %v373, %v375
    %v381 = vsel %vm378, %v371, %v373
    %v382 = vsel %vm378, %v377, %v371
    %v383 = vmul.f32 %v381, %v200
    %v384 = vmul.f32 %v380, %v201
    %v385 = vmul.f32 %v379, %v202
    %v386 = vmul.f32 %v382, %v203
    %v387 = vadd.f32 %v366, %v383
    %v388 = vadd.f32 %v367, %v384
    %v389 = vadd.f32 %v368, %v385
    %v390 = vadd.f32 %v369, %v386
    %v391 = vld [vmem:[%s2] sm:$0xff]
    %393 = vset.pattern.permute.xlu0 0
    %394 = vperm.xlu0 %393, %v391
    %v395 = vpop.permute.xlu0 %394
    %v397 = vadd.f32 %v387, %v395
    %v398 = vadd.f32 %v388, %v395
    %v399 = vadd.f32 %v389, %v395
    %v400 = vadd.f32 %v390, %v395
    %v401 = vmax.f32 %v397, 0.0
    %v402 = vmax.f32 %v398, 0.0
    %v403 = vmax.f32 %v399, 0.0
    %v404 = vmax.f32 %v400, 0.0
    %v405 = vld [vmem:[%s3] sm:$0xf]
    %v406 = vpack.c.bf16 %v401, %v401
    %v407 = vpack.c.bf16 %v402, %v402
    %v408 = vpack.c.bf16 %v403, %v403
    %v409 = vpack.c.bf16 %v404, %v404
    %v410 = vld [vmem:[%s4] sm:$0xff]
    %412 = vset.pattern.permute.xlu0 0
    %413 = vperm.xlu0 %412, %v410
    %v414 = vpop.permute.xlu0 %413
    %vm416 = vcmask 64512
    %v418 = vsel %vm416, %v405, 0
    %v421 = vsel %vm264, %v406, 0
    %v424 = vsel %vm264, %v407, 0
    %v427 = vsel %vm264, %v408, 0
    %v430 = vsel %vm264, %v409, 0
    %432 = vmatpush.bf16.msra.mxu0 0
    %433 = vmatpush.bf16.msra.mxu0 0
    %434 = vmatpush.bf16.msra.mxu0 0
    %435 = vmatpush.bf16.msra.mxu0 0
    %436 = vmatpush.bf16.msra.mxu0 0
    %437 = vmatpush.bf16.msra.mxu0 0
    %438 = vmatpush.bf16.msra.mxu0 0
    %439 = vmatpush.bf16.msra.mxu0 %v421
    %440 = vmatmul.bf16.gmra.mxu0 %v418
    %v441 = vpop.f32.mrf.mxu0
    %v442 = vadd.f32 %v414, %v441
    %v443 = vpop.f32.mrf.mxu0
    %444 = vdwg.mxu0
    %445 = vmatpush.bf16.msra.mxu0 0
    %446 = vmatpush.bf16.msra.mxu0 0
    %447 = vmatpush.bf16.msra.mxu0 0
    %448 = vmatpush.bf16.msra.mxu0 0
    %449 = vmatpush.bf16.msra.mxu0 0
    %450 = vmatpush.bf16.msra.mxu0 0
    %451 = vmatpush.bf16.msra.mxu0 0
    %452 = vmatpush.bf16.msra.mxu0 %v424
    %453 = vmatmul.bf16.gmra.mxu0 %v418
    %v454 = vpop.f32.mrf.mxu0
    %v455 = vadd.f32 %v414, %v454
    %v456 = vpop.f32.mrf.mxu0
    %457 = vdwg.mxu0
    %458 = vmatpush.bf16.msra.mxu0 0
    %459 = vmatpush.bf16.msra.mxu0 0
    %460 = vmatpush.bf16.msra.mxu0 0
    %461 = vmatpush.bf16.msra.mxu0 0
    %462 = vmatpush.bf16.msra.mxu0 0
    %463 = vmatpush.bf16.msra.mxu0 0
    %464 = vmatpush.bf16.msra.mxu0 0
    %465 = vmatpush.bf16.msra.mxu0 %v427
    %466 = vmatmul.bf16.gmra.mxu0 %v418
    %v467 = vpop.f32.mrf.mxu0
    %v468 = vadd.f32 %v414, %v467
    %v469 = vpop.f32.mrf.mxu0
    %470 = vdwg.mxu0
    %471 = vmatpush.bf16.msra.mxu0 0
    %472 = vmatpush.bf16.msra.mxu0 0
    %473 = vmatpush.bf16.msra.mxu0 0
    %474 = vmatpush.bf16.msra.mxu0 0
    %475 = vmatpush.bf16.msra.mxu0 0
    %476 = vmatpush.bf16.msra.mxu0 0
    %477 = vmatpush.bf16.msra.mxu0 0
    %478 = vmatpush.bf16.msra.mxu0 %v430
    %479 = vmatmul.bf16.gmra.mxu0 %v418
    %v480 = vpop.f32.mrf.mxu0
    %v481 = vadd.f32 %v414, %v480
    %v482 = vpop.f32.mrf.mxu0
    %483 = vdwg.mxu0
    %484 = vst [vmem:[#allocation5] sm:$0xff] %v442
    %485 = vst [vmem:[#allocation5 + $0x8] sm:$0xff] %v455
    %s486 = scalar_lea.vmem [#allocation5], 16
    %487 = vst [vmem:[%s486] sm:$0xff] %v468
    %488 = vst [vmem:[%s486 + $0x8] sm:$0xff] %v481
    // Predicated region
    $region26: #{tpu_custom_call.1} parent=1 // pred_check
      _
    $region27: #{tpu_custom_call.1} parent=1 // pred_check_branch
      %490 = sbr.rel (0) target = $region29
    $region28: #{tpu_custom_call.1} parent=1 // pred_region
      %492 = vsyncadd [#allocation4], 0
      %s493 = sshll.u32 [#allocation5], 4
      %s494 = int_to_ptr.vmem [resolvable:$true] %s493
      %s495 = sshll.u32 %s5, 4
      %s496 = int_to_ptr.hbm [resolvable:$true] %s495
      %501 = dma.vmem_to_hbm [thread:$0]  %s494, 512, %s496, [#allocation4], 256, 256, 16
    $region29: #{tpu_custom_call.1} parent=1 // pred_fallthru
      _
    // Predicated region
    $region30: #{tpu_custom_call.1} parent=1 // pred_check
      _
    $region31: #{tpu_custom_call.1} parent=1 // pred_check_branch
      %503 = sbr.rel (0) target = $region33
    $region32: #{tpu_custom_call.1} parent=1 // pred_region
      %505 = dma.done [#allocation4], 512
    $region33: #{tpu_custom_call.1} parent=1 // pred_fallthru
      _
    %506 = vsyncpa [#allocation3], 1
    %507 = vsyncpa [#allocation4], 1

</llo_original>
